<compile_context>
chip_gen: v7x
topology: tpu7x:2x2x1
jax: 0.10.0
libtpu: 0.0.40
codegen_flags: <defaults>
</compile_context>

<pallas_src>
import math

import jax
import jax.numpy as jnp
from jax.experimental import pallas as pl
from jax.experimental.pallas import tpu as pltpu


def _attention_kernel(x_ref, w_ref, o_ref):
    # x_ref: (b_tile, T, C) VMEM (native dtype, pipelined)
    # w_ref: (1, 1, C)      VMEM (resident: constant index_map)
    # o_ref: (b_tile, 1, T) VMEM (lane-dense over T)
    b_tile, _, C = x_ref.shape

    # Tiny once-per-step broadcast of the resident weight.
    w = jnp.broadcast_to(w_ref[...], (b_tile, 1, C))

    # 1x1 Conv1d == per-position dot over C, done on the MXU as a batched
    # matmul (flash-attention 'bqd,bkd->bqk' pattern with q-length 1).
    # preferred_element_type does the f32 accumulation (no x upcast in VMEM);
    # HIGHEST precision keeps the f32 contraction exact (MXU is idle anyway).
    att = jnp.einsum(
        "bzc,btc->bzt",
        w,
        x_ref[...],
        preferred_element_type=jnp.float32,
        precision=jax.lax.Precision.HIGHEST,
    )  # (b_tile, 1, T) float32

    # Softmax over the sequence axis (PyTorch dim=1), here the last (lane) axis.
    m = jnp.max(att, axis=-1, keepdims=True)
    e = jnp.exp(att - m)
    denom = jnp.sum(e, axis=-1, keepdims=True)
    o_ref[...] = (e / denom).astype(o_ref.dtype)  # exact divide (correctness)


def _choose_b_tile(B, T, C, itemsize, budget_bytes=8 << 20):
    """Batch-tile size: large enough to amortize ~0.35us per-grid-step overhead,
    small enough that double-buffered x blocks stay well under the 48 MiB vmem
    limit (v7x: 64 MiB/TC), and capped at cdiv(B, 2) so the grid has at least
    two steps for v7x's two TensorCores."""
    per_row = max(1, T * C * itemsize)
    rows = max(1, budget_bytes // per_row)
    rows = min(rows, max(1, pl.cdiv(B, 2)))  # >= 2 grid steps when B >= 2
    return min(B, rows)


def attention_forward(x, weight, bias=None):
    """x: (B, T, C); weight: (C,) = Conv1d(att_size, 1, 1) weight.

    The Conv1d bias is accepted for API parity but ignored: softmax over T is
    shift-invariant, so adding a single scalar to every logit cannot change the
    output.  Returns (B, T, 1) float32 attention weights."""
    del bias
    B, T, C = x.shape
    w = weight.reshape(1, 1, C).astype(x.dtype)

    b_tile = _choose_b_tile(B, T, C, x.dtype.itemsize)
    grid = (pl.cdiv(B, b_tile),)

    out = pl.pallas_call(
        _attention_kernel,
        out_shape=jax.ShapeDtypeStruct((B, 1, T), jnp.float32),
        grid=grid,
        in_specs=[
            pl.BlockSpec((b_tile, T, C), lambda i: (i, 0, 0)),  # x tile (pipelined)
            pl.BlockSpec((1, 1, C), lambda i: (0, 0, 0)),       # weight (resident)
        ],
        out_specs=pl.BlockSpec((b_tile, 1, T), lambda i: (i, 0, 0)),
        compiler_params=pltpu.CompilerParams(
            dimension_semantics=("parallel",),   # megacore sharding on v7x
            vmem_limit_bytes=48 * 1024 * 1024,   # < v7x 64 MiB/TC; > v5e 16 MiB default
        ),
    )(x, w)

    # (B, 1, T) -> (B, T, 1): same row-major linearization, metadata-only.
    return out.reshape(B, T, 1)


def reference_forward(x, weight, bias):
    # Plain-JAX reference mirroring the PyTorch forward (bias included).
    att = (
        jnp.einsum("btc,c->bt", x, weight, precision=jax.lax.Precision.HIGHEST)
        + bias
    )                                                   # conv1d(1x1) + squeeze(1)
    return jax.nn.softmax(att, axis=1)[..., None]       # softmax(dim=1).unsqueeze(2)


if __name__ == "__main__":
    key = jax.random.PRNGKey(0)
    k_x, k_w, k_b = jax.random.split(key, 3)

    B, T, C = 2, 8, 32  # batch=2, seq=8, att_size (hidden) = 32

    x = jax.random.normal(k_x, (B, T, C), dtype=jnp.float32)

    # Conv1d(att_size, 1, 1) weight shape is (1, att_size, 1); xavier_uniform_:
    # bound = sqrt(6 / (fan_in + fan_out)) with fan_in = att_size, fan_out = 1.
    bound_w = math.sqrt(6.0 / (C + 1))
    weight = jax.random.uniform(k_w, (C,), jnp.float32, -bound_w, bound_w)
    # Conv1d default bias init: uniform(-1/sqrt(fan_in), 1/sqrt(fan_in)).
    bound_b = 1.0 / math.sqrt(C)
    bias = jax.random.uniform(k_b, (), jnp.float32, -bound_b, bound_b)

    out = attention_forward(x, weight, bias)
    out = jax.block_until_ready(out)

    ref = reference_forward(x, weight, bias)
    assert out.shape == (B, T, 1)
    assert jnp.allclose(out, ref, atol=1e-5, rtol=1e-4)
    assert jnp.allclose(jnp.sum(out, axis=1), 1.0, atol=1e-5)

    print("KERNEL_OK")
</pallas_src>

<mosaic_0001>
module attributes {stable_mosaic.version = 11 : i64} {
  func.func @_attention_kernel(%arg0: i32, %arg1: memref<1x8x32xf32, #tpu.memory_space<vmem>>, %arg2: memref<1x1x32xf32, #tpu.memory_space<vmem>>, %arg3: memref<1x1x8xf32, #tpu.memory_space<vmem>>) attributes {dimension_semantics = [#tpu.dimension_semantics<parallel>], iteration_bounds = array<i64: 2>, scalar_prefetch = 0 : i64, scratch_operands = 0 : i64, tpu.core_type = #tpu.core_type<tc>, window_params = [{transform_indices = @transform_0, window_bounds = array<i64: 1, 8, 32>}, {pipeline_mode = #tpu.pipeline_mode<synchronous>, transform_indices = @transform_1, window_bounds = array<i64: 1, 1, 32>}, {transform_indices = @transform_2, window_bounds = array<i64: 1, 1, 8>}]} {
    %c0 = arith.constant 0 : index
    %c0_0 = arith.constant 0 : index
    %c0_1 = arith.constant 0 : index
    %0 = vector.load %arg2[%c0, %c0_0, %c0_1] : memref<1x1x32xf32, #tpu.memory_space<vmem>>, vector<1x1x32xf32>
    %c0_2 = arith.constant 0 : index
    %c0_3 = arith.constant 0 : index
    %c0_4 = arith.constant 0 : index
    %1 = vector.load %arg1[%c0_2, %c0_3, %c0_4] : memref<1x8x32xf32, #tpu.memory_space<vmem>>, vector<1x8x32xf32>
    "tpu.trace_start"() <{level = 10 : i32, message = "bzc,btc->bzt"}> : () -> ()
    %cst = arith.constant dense<0.000000e+00> : vector<1x1x8xf32>
    %2 = tpu.matmul %0, %1, %cst {dimension_numbers = #tpu.dot_dimension_numbers<[2], [2], [1], [1], [0, 0, 0, 1, 1, 1], [0], [0]>, precision = #tpu.contract_precision<fp32>} : vector<1x1x32xf32>, vector<1x8x32xf32>, vector<1x1x8xf32> -> vector<1x1x8xf32>
    "tpu.trace_stop"() : () -> ()
    %cst_5 = arith.constant dense<0xFF800000> : vector<1x1xf32>
    %3 = vector.multi_reduction <maximumf>, %2, %cst_5 [2] : vector<1x1x8xf32> to vector<1x1xf32>
    %4 = vector.shape_cast %3 : vector<1x1xf32> to vector<1x1x1xf32>
    %5 = vector.broadcast %4 : vector<1x1x1xf32> to vector<1x1x8xf32>
    %6 = arith.subf %2, %5 : vector<1x1x8xf32>
    %7 = math.exp %6 : vector<1x1x8xf32>
    %cst_6 = arith.constant dense<0.000000e+00> : vector<1x1xf32>
    %8 = vector.multi_reduction <add>, %7, %cst_6 [2] : vector<1x1x8xf32> to vector<1x1xf32>
    %9 = vector.shape_cast %8 : vector<1x1xf32> to vector<1x1x1xf32>
    %10 = vector.broadcast %9 : vector<1x1x1xf32> to vector<1x1x8xf32>
    %11 = arith.divf %7, %10 : vector<1x1x8xf32>
    %c0_7 = arith.constant 0 : index
    %c0_8 = arith.constant 0 : index
    %c0_9 = arith.constant 0 : index
    %12 = vector.load %arg3[%c0_7, %c0_8, %c0_9] : memref<1x1x8xf32, #tpu.memory_space<vmem>>, vector<1x1x8xf32>
    tpu.vector_store %arg3[%c0_7, %c0_8, %c0_9], %11 {strides = array<i32>} : memref<1x1x8xf32, #tpu.memory_space<vmem>>, vector<1x1x8xf32>,
    return
  }
  func.func @transform_0(%arg0: i32) -> (i32, i32, i32) {
    %c0_i32 = arith.constant 0 : i32
    %c0_i32_0 = arith.constant 0 : i32
    %c0_i32_1 = arith.constant 0 : i32
    return %arg0, %c0_i32, %c0_i32_0 : i32, i32, i32
  }
  func.func @transform_1(%arg0: i32) -> (i32, i32, i32) {
    %c0_i32 = arith.constant 0 : i32
    %c0_i32_0 = arith.constant 0 : i32
    %c0_i32_1 = arith.constant 0 : i32
    %c0_i32_2 = arith.constant 0 : i32
    return %c0_i32, %c0_i32_0, %c0_i32_1 : i32, i32, i32
  }
  func.func @transform_2(%arg0: i32) -> (i32, i32, i32) {
    %c0_i32 = arith.constant 0 : i32
    %c0_i32_0 = arith.constant 0 : i32
    %c0_i32_1 = arith.constant 0 : i32
    return %arg0, %c0_i32, %c0_i32_0 : i32, i32, i32
  }
}

</mosaic_0001>

<llo_original>
// kernel: tpu_custom_call.1
$region0: #{tpu_custom_call.1}
  #allocation0 [shape = 'u32[]', space=smem, size = 0x4, offset = 0x4, fixed_abs, tag = 'smem constant byte address 0x4 - core index']
  #allocation1 [shape = 'u32[144,128]{1,0:T(1,128)}', space=vmem, size = 0x12000, scoped, tag = 'internal scratch']
  %s0 = inlined_call_operand.hbm [shape: f32[2,8,32], index: 0, kind: input, shape index: {}]
  %s1 = inlined_call_operand.vmem [shape: f32[1,1,32], index: 1, kind: input, shape index: {}]
  %s2 = inlined_call_operand.hbm [shape: f32[2,1,8], index: 2, kind: output, shape index: {}]
  %s3 = sld [smem:[#allocation0]]
  $region45: #{tpu_custom_call.1} parent=0
    _
  %s5 = ssub.s32 1, %s3
  %s6 = scalar_select 0, %s5, %s3
  $region1: #{tpu_custom_call.1} parent=0
    #allocation2 [shape = 'u8[8192]{0}', space=vmem, size = 0x2000, scoped, tag = 'input window, operand 0']
    #allocation3 [shape = 's32[2]{0}', space=sflag, size = 0x8, scoped, tag = 'scoped memory for tpu_custom_call.1']
    #allocation4 [shape = 's32[2]{0}', space=sflag, size = 0x8, scoped, tag = 'scoped memory for tpu_custom_call.1']
    #allocation5 [shape = 'u8[1024]{0}', space=vmem, size = 0x400, scoped, tag = 'output window, operand 0']
    %7 = vsyncpa [#allocation3], 0
    %s8 = scalar_lea.sflag [#allocation3], 1
    %9 = vsyncpa %s8, 0
    %10 = vsyncpa [#allocation4], 0
    %s11 = scalar_lea.sflag [#allocation4], 1
    %12 = vsyncpa %s11, 0
    loop: start=0, step=1, limit=4
    $region2: #{tpu_custom_call.1} parent=1 // loop_pre_header
      _
    $region3: #{tpu_custom_call.1} parent=1 // loop_header
      %s14 = sphi 0, %s18
      %p15 = scmp.ge.s32.totalorder %s14, 4
      %s24 = sphi 0, %s26
      %s27 = sphi 0, %s24
      %s28 = sphi 0, %s27
      %s44 = sphi 0, %s28
      %s48 = sphi 0, %s48
      %s50 = sphi 0, %s48
      %s51 = sphi 0, %s50
      %s65 = sphi 0, %s51
      %s71 = sphi 0, %s73
      %s74 = sphi 0, %s71
      %s75 = sphi 0, %s74
      %s91 = sphi 0, %s75
    $region4: #{tpu_custom_call.1} parent=1 // loop_header_branch
      %17 = sbr.rel (%p15) target = $region8
    $region5: #{tpu_custom_call.1} parent=1 // loop_body
      %s19 = ssub.s32 %s14, 1
      %s20 = ssub.s32 %s14, 2
      %s21 = sadd.s32 %s14, 1
      %s22 = ssub.s32 %s14, %s21
      %p23 = scmp.eq.s32.totalorder %s22, 0
      %s25 = sadd.s32 %s24, 1
      %s26 = scalar_select %p23, %s24, %s25
      %p29 = pneg %p23
      %p30 = scmp.eq.s32.totalorder %s14, 1
      %p31 = por %p29, %p30
      %p32 = scmp.ne.s32.totalorder %s24, %s27
      %p33 = scmp.eq.s32.totalorder %s14, 0
      %p34 = por %p32, %p33
      %p35 = scmp.ne.s32.totalorder %s24, %s27
      %p36 = scmp.eq.s32.totalorder %s19, 1
      %p37 = por %p35, %p36
      %p38 = scmp.ne.s32.totalorder %s27, %s28
      %p39 = scmp.eq.s32.totalorder %s19, 0
      %p40 = por %p38, %p39
      %p41 = scmp.ne.s32.totalorder %s27, %s28
      %p42 = scmp.eq.s32.totalorder %s20, 1
      %p43 = por %p41, %p42
      %p45 = scmp.ne.s32.totalorder %s28, %s44
      %p46 = scmp.eq.s32.totalorder %s20, 0
      %p47 = por %p45, %p46
      %s49 = sadd.s32 %s48, 1
      %p52 = scmp.eq.s32.totalorder %s14, 1
      %p53 = scmp.ne.s32.totalorder %s48, %s50
      %p54 = scmp.eq.s32.totalorder %s14, 0
      %p55 = por %p53, %p54
      %p56 = scmp.ne.s32.totalorder %s48, %s50
      %p57 = scmp.eq.s32.totalorder %s19, 1
      %p58 = por %p56, %p57
      %p59 = scmp.ne.s32.totalorder %s50, %s51
      %p60 = scmp.eq.s32.totalorder %s19, 0
      %p61 = por %p59, %p60
      %p62 = scmp.ne.s32.totalorder %s50, %s51
      %p63 = scmp.eq.s32.totalorder %s20, 1
      %p64 = por %p62, %p63
      %p66 = scmp.ne.s32.totalorder %s51, %s65
      %p67 = scmp.eq.s32.totalorder %s20, 0
      %p68 = por %p66, %p67
      %s69 = ssub.s32 %s14, %s21
      %p70 = scmp.eq.s32.totalorder %s69, 0
      %s72 = sadd.s32 %s71, 1
      %s73 = scalar_select %p70, %s71, %s72
      %p76 = pneg %p70
      %p77 = scmp.eq.s32.totalorder %s14, 1
      %p78 = por %p76, %p77
      %p79 = scmp.ne.s32.totalorder %s71, %s74
      %p80 = scmp.eq.s32.totalorder %s14, 0
      %p81 = por %p79, %p80
      %p82 = scmp.ne.s32.totalorder %s71, %s74
      %p83 = scmp.eq.s32.totalorder %s19, 1
      %p84 = por %p82, %p83
      %p85 = scmp.ne.s32.totalorder %s74, %s75
      %p86 = scmp.eq.s32.totalorder %s19, 0
      %p87 = por %p85, %p86
      %p88 = scmp.ne.s32.totalorder %s74, %s75
      %p89 = scmp.eq.s32.totalorder %s20, 1
      %p90 = por %p88, %p89
      %p92 = scmp.ne.s32.totalorder %s75, %s91
      %p93 = scmp.eq.s32.totalorder %s20, 0
      %p94 = por %p92, %p93
      %p95 = scmp.le.s32.totalorder 1, %s14
      %p96 = scmp.lt.s32.totalorder %s14, 3
      %p97 = pnand %p95, %p96
      %p98 = pneg %p97
      // Predicated region
      $region9: #{tpu_custom_call.1} parent=5 // pred_check
        _
      $region10: #{tpu_custom_call.1} parent=5 // pred_check_branch
        %100 = sbr.rel (%p97) target = $region12
      $region11: #{tpu_custom_call.1} parent=5 // pred_region
        %s101 = ssub.s32 %s14, 1
        // Predicated region
        $region13: #{tpu_custom_call.1} parent=11 // pred_check
          %p102 = pneg %p61
        $region14: #{tpu_custom_call.1} parent=11 // pred_check_branch
          %104 = sbr.rel (%p102) target = $region16
        $region15: #{tpu_custom_call.1} parent=11 // pred_region
          _
        $region16: #{tpu_custom_call.1} parent=11 // pred_fallthru
          _
      $region12: #{tpu_custom_call.1} parent=5 // pred_fallthru
        _
      %p105 = scmp.lt.s32.totalorder %s14, 2
      // Predicated region
      $region17: #{tpu_custom_call.1} parent=5 // pred_check
        %p106 = pneg %p105
      $region18: #{tpu_custom_call.1} parent=5 // pred_check_branch
        %108 = sbr.rel (%p106) target = $region20
      $region19: #{tpu_custom_call.1} parent=5 // pred_region
        // Predicated region
        $region21: #{tpu_custom_call.1} parent=19 // pred_check
          %p109 = pneg %p34
        $region22: #{tpu_custom_call.1} parent=19 // pred_check_branch
          %111 = sbr.rel (%p109) target = $region24
        $region23: #{tpu_custom_call.1} parent=19 // pred_region
          %s112 = sand.u32 %s24, 1
          %s113 = scalar_lea.sflag [#allocation3], %s112
          %s114 = sand.u32 %s24, 1
          %s115 = smul.addr %s114, 8
          %s116 = scalar_lea.vmem [#allocation2], %s115
          %s118 = ssub.s32 128, 128
          %119 = vsyncadd %s113, %s118
          %s120 = smul.addr %s14, 128
          %s121 = scalar_lea.hbm %s0, %s120
          %s123 = sshll.u32 %s116, 4
          %s124 = int_to_ptr.vmem [resolvable:$true] %s123
          %126 = dma.hbm_to_vmem [thread:$0]  %s121, 128, %s124, %s113
        $region24: #{tpu_custom_call.1} parent=19 // pred_fallthru
          _
      $region20: #{tpu_custom_call.1} parent=5 // pred_fallthru
        _
      %p127 = scmp.le.s32.totalorder 1, %s14
      %p128 = scmp.lt.s32.totalorder %s14, 3
      %p129 = pnand %p127, %p128
      %p130 = pneg %p129
      // Predicated region
      $region25: #{tpu_custom_call.1} parent=5 // pred_check
        _
      $region26: #{tpu_custom_call.1} parent=5 // pred_check_branch
        %132 = sbr.rel (%p129) target = $region28
      $region27: #{tpu_custom_call.1} parent=5 // pred_region
        %s133 = ssub.s32 %s14, 1
        %s134 = sand.u32 %s27, 1
        %s135 = scalar_lea.sflag [#allocation3], %s134
        %s136 = sand.u32 %s27, 1
        %s137 = smul.addr %s136, 8
        %s138 = scalar_lea.vmem [#allocation2], %s137
        // Predicated region
        $region29: #{tpu_custom_call.1} parent=27 // pred_check
          %p139 = pneg %p40
        $region30: #{tpu_custom_call.1} parent=27 // pred_check_branch
          %141 = sbr.rel (%p139) target = $region32
        $region31: #{tpu_custom_call.1} parent=27 // pred_region
          %142 = dma.done %s135, 128
        $region32: #{tpu_custom_call.1} parent=27 // pred_fallthru
          _
        %s143 = sand.u32 %s27, 1
        %s144 = scalar_lea.sflag [#allocation3], %s143
        %s145 = sand.u32 %s27, 1
        %s146 = smul.addr %s145, 8
        %s147 = scalar_lea.vmem [#allocation2], %s146
        %p148 = pneg %p40
        %p149 = pneg %p37
        %p150 = pneg %p61
        %p151 = pneg %p58
        %p152 = pneg %p87
        %p153 = pneg %p84
        %s154 = sand.u32 %s74, 1
        %s155 = scalar_lea.sflag [#allocation4], %s154
        %s156 = sand.u32 %s74, 1
        %s157 = scalar_lea.vmem [#allocation5], %s156
        %v158 = vld [vmem:[%s1] sm:$0x1]
        %v159 = vld [vmem:[%s138] sm:$0xff]
        %vm160 = vcmask 261120
        %v162 = vsel %vm160, %v158, 0
        %v165 = vsel %vm160, %v159, 0
        %167 = vmatprep.subr.mxu0 0.0
        %v168 = vand.u32 %v165, 4294901760
        %169 = vmatpush1.xpose.msra.mxu0 %v168
        %170 = vmatprep.subr.mxu0 0.0
        %171 = vmatpush1.xpose.msra.mxu0 0.0
        %172 = vmatprep.subr.mxu0 0.0
        %173 = vmatpush1.xpose.msra.mxu0 0.0
        %174 = vmatprep.subr.mxu0 0.0
        %175 = vmatpush1.xpose.msra.mxu0 0.0
        %176 = vmatprep.subr.mxu0 0.0
        %177 = vmatpush1.xpose.msra.mxu0 0.0
        %178 = vmatprep.subr.mxu0 0.0
        %179 = vmatpush1.xpose.msra.mxu0 0.0
        %180 = vmatprep.subr.mxu0 0.0
        %181 = vmatpush1.xpose.msra.mxu0 0.0
        %182 = vmatprep.subr.mxu0 0.0
        %183 = vmatpush1.xpose.msra.mxu0 0.0
        %184 = vmatprep.subr.mxu0 0.0
        %185 = vmatpush1.xpose.msra.mxu0 0.0
        %186 = vmatprep.subr.mxu0 0.0
        %187 = vmatpush1.xpose.msra.mxu0 0.0
        %188 = vmatprep.subr.mxu0 0.0
        %189 = vmatpush1.xpose.msra.mxu0 0.0
        %190 = vmatprep.subr.mxu0 0.0
        %191 = vmatpush1.xpose.msra.mxu0 0.0
        %192 = vmatprep.subr.mxu0 0.0
        %193 = vmatpush1.xpose.msra.mxu0 0.0
        %194 = vmatprep.subr.mxu0 0.0
        %195 = vmatpush1.xpose.msra.mxu0 0.0
        %196 = vmatprep.subr.mxu0 0.0
        %197 = vmatpush1.xpose.msra.mxu0 0.0
        %198 = vmatprep.subr.mxu0 0.0
        %199 = vmatpush1.xpose.msra.mxu0 0.0
        %200 = vmatprep.subr.mxu0 0.0
        %201 = vmatpush1.xpose.msra.mxu0 0.0
        %202 = vmatprep.subr.mxu0 0.0
        %203 = vmatpush1.xpose.msra.mxu0 0.0
        %204 = vmatprep.subr.mxu0 0.0
        %205 = vmatpush1.xpose.msra.mxu0 0.0
        %206 = vmatprep.subr.mxu0 0.0
        %207 = vmatpush1.xpose.msra.mxu0 0.0
        %208 = vmatprep.subr.mxu0 0.0
        %209 = vmatpush1.xpose.msra.mxu0 0.0
        %210 = vmatprep.subr.mxu0 0.0
        %211 = vmatpush1.xpose.msra.mxu0 0.0
        %212 = vmatprep.subr.mxu0 0.0
        %213 = vmatpush1.xpose.msra.mxu0 0.0
        %214 = vmatprep.subr.mxu0 0.0
        %215 = vmatpush1.xpose.msra.mxu0 0.0
        %216 = vmatprep.subr.mxu0 0.0
        %217 = vmatpush1.xpose.msra.mxu0 0.0
        %218 = vmatprep.subr.mxu0 0.0
        %219 = vmatpush1.xpose.msra.mxu0 0.0
        %220 = vmatprep.subr.mxu0 0.0
        %221 = vmatpush1.xpose.msra.mxu0 0.0
        %222 = vmatprep.subr.mxu0 0.0
        %223 = vmatpush1.xpose.msra.mxu0 0.0
        %224 = vmatprep.subr.mxu0 0.0
        %225 = vmatpush1.xpose.msra.mxu0 0.0
        %226 = vmatprep.subr.mxu0 0.0
        %227 = vmatpush1.xpose.msra.mxu0 0.0
        %228 = vmatprep.subr.mxu0 0.0
        %229 = vmatpush1.xpose.msra.mxu0 0.0
        %230 = vmatprep.subr.mxu0 0.0
        %231 = vmatpush1.xpose.msra.mxu0 0.0
        %232 = vmatprep.mubr.f32.mxu0 0.0
        %v233 = vand.u32 %v162, 4294901760
        %v234 = vsub.f32 %v162, %v233
        %v235 = vand.u32 %v234, 4294901760
        %v236 = vsub.f32 %v234, %v235
        %v237 = vand.u32 %v236, 4294901760
        %238 = vmatmul.mubr.f32.gmra.mrb[0].mxu0 %v237
        %v239 = vpop.f32.mrb[0].mxu0
        %v240 = vadd.f32 0.0, %v239
        %v241 = vpop.f32.mrb[0].mxu0
        %242 = vdwg.mxu0
        %243 = vmatprep.subr.mxu0 0.0
        %v244 = vand.u32 %v165, 4294901760
        %v245 = vsub.f32 %v165, %v244
        %v246 = vand.u32 %v245, 4294901760
        %v247 = vsub.f32 %v245, %v246
        %v248 = vand.u32 %v247, 4294901760
        %249 = vmatpush1.xpose.msra.mxu0 %v248
        %250 = vmatprep.subr.mxu0 0.0
        %251 = vmatpush1.xpose.msra.mxu0 0.0
        %252 = vmatprep.subr.mxu0 0.0
        %253 = vmatpush1.xpose.msra.mxu0 0.0
        %254 = vmatprep.subr.mxu0 0.0
        %255 = vmatpush1.xpose.msra.mxu0 0.0
        %256 = vmatprep.subr.mxu0 0.0
        %257 = vmatpush1.xpose.msra.mxu0 0.0
        %258 = vmatprep.subr.mxu0 0.0
        %259 = vmatpush1.xpose.msra.mxu0 0.0
        %260 = vmatprep.subr.mxu0 0.0
        %261 = vmatpush1.xpose.msra.mxu0 0.0
        %262 = vmatprep.subr.mxu0 0.0
        %263 = vmatpush1.xpose.msra.mxu0 0.0
        %264 = vmatprep.subr.mxu0 0.0
        %265 = vmatpush1.xpose.msra.mxu0 0.0
        %266 = vmatprep.subr.mxu0 0.0
        %267 = vmatpush1.xpose.msra.mxu0 0.0
        %268 = vmatprep.subr.mxu0 0.0
        %269 = vmatpush1.xpose.msra.mxu0 0.0
        %270 = vmatprep.subr.mxu0 0.0
        %271 = vmatpush1.xpose.msra.mxu0 0.0
        %272 = vmatprep.subr.mxu0 0.0
        %273 = vmatpush1.xpose.msra.mxu0 0.0
        %274 = vmatprep.subr.mxu0 0.0
        %275 = vmatpush1.xpose.msra.mxu0 0.0
        %276 = vmatprep.subr.mxu0 0.0
        %277 = vmatpush1.xpose.msra.mxu0 0.0
        %278 = vmatprep.subr.mxu0 0.0
        %279 = vmatpush1.xpose.msra.mxu0 0.0
        %280 = vmatprep.subr.mxu0 0.0
        %281 = vmatpush1.xpose.msra.mxu0 0.0
        %282 = vmatprep.subr.mxu0 0.0
        %283 = vmatpush1.xpose.msra.mxu0 0.0
        %284 = vmatprep.subr.mxu0 0.0
        %285 = vmatpush1.xpose.msra.mxu0 0.0
        %286 = vmatprep.subr.mxu0 0.0
        %287 = vmatpush1.xpose.msra.mxu0 0.0
        %288 = vmatprep.subr.mxu0 0.0
        %289 = vmatpush1.xpose.msra.mxu0 0.0
        %290 = vmatprep.subr.mxu0 0.0
        %291 = vmatpush1.xpose.msra.mxu0 0.0
        %292 = vmatprep.subr.mxu0 0.0
        %293 = vmatpush1.xpose.msra.mxu0 0.0
        %294 = vmatprep.subr.mxu0 0.0
        %295 = vmatpush1.xpose.msra.mxu0 0.0
        %296 = vmatprep.subr.mxu0 0.0
        %297 = vmatpush1.xpose.msra.mxu0 0.0
        %298 = vmatprep.subr.mxu0 0.0
        %299 = vmatpush1.xpose.msra.mxu0 0.0
        %300 = vmatprep.subr.mxu0 0.0
        %301 = vmatpush1.xpose.msra.mxu0 0.0
        %302 = vmatprep.subr.mxu0 0.0
        %303 = vmatpush1.xpose.msra.mxu0 0.0
        %304 = vmatprep.subr.mxu0 0.0
        %305 = vmatpush1.xpose.msra.mxu0 0.0
        %306 = vmatprep.subr.mxu0 0.0
        %307 = vmatpush1.xpose.msra.mxu0 0.0
        %308 = vmatprep.subr.mxu0 0.0
        %309 = vmatpush1.xpose.msra.mxu0 0.0
        %310 = vmatprep.subr.mxu0 0.0
        %311 = vmatpush1.xpose.msra.mxu0 0.0
        %312 = vmatprep.mubr.f32.mxu0 0.0
        %v313 = vand.u32 %v162, 4294901760
        %314 = vmatmul.mubr.f32.gmra.mrb[0].mxu0 %v313
        %v315 = vpop.f32.mrb[0].mxu0
        %v316 = vadd.f32 %v240, %v315
        %v317 = vpop.f32.mrb[0].mxu0
        %318 = vdwg.mxu0
        %319 = vmatprep.subr.mxu0 0.0
        %v320 = vand.u32 %v165, 4294901760
        %v321 = vsub.f32 %v165, %v320
        %322 = vmatpush1.xpose.msra.mxu0 %v321
        %323 = vmatprep.subr.mxu0 0.0
        %324 = vmatpush1.xpose.msra.mxu0 0.0
        %325 = vmatprep.subr.mxu0 0.0
        %326 = vmatpush1.xpose.msra.mxu0 0.0
        %327 = vmatprep.subr.mxu0 0.0
        %328 = vmatpush1.xpose.msra.mxu0 0.0
        %329 = vmatprep.subr.mxu0 0.0
        %330 = vmatpush1.xpose.msra.mxu0 0.0
        %331 = vmatprep.subr.mxu0 0.0
        %332 = vmatpush1.xpose.msra.mxu0 0.0
        %333 = vmatprep.subr.mxu0 0.0
        %334 = vmatpush1.xpose.msra.mxu0 0.0
        %335 = vmatprep.subr.mxu0 0.0
        %336 = vmatpush1.xpose.msra.mxu0 0.0
        %337 = vmatprep.subr.mxu0 0.0
        %338 = vmatpush1.xpose.msra.mxu0 0.0
        %339 = vmatprep.subr.mxu0 0.0
        %340 = vmatpush1.xpose.msra.mxu0 0.0
        %341 = vmatprep.subr.mxu0 0.0
        %342 = vmatpush1.xpose.msra.mxu0 0.0
        %343 = vmatprep.subr.mxu0 0.0
        %344 = vmatpush1.xpose.msra.mxu0 0.0
        %345 = vmatprep.subr.mxu0 0.0
        %346 = vmatpush1.xpose.msra.mxu0 0.0
        %347 = vmatprep.subr.mxu0 0.0
        %348 = vmatpush1.xpose.msra.mxu0 0.0
        %349 = vmatprep.subr.mxu0 0.0
        %350 = vmatpush1.xpose.msra.mxu0 0.0
        %351 = vmatprep.subr.mxu0 0.0
        %352 = vmatpush1.xpose.msra.mxu0 0.0
        %353 = vmatprep.subr.mxu0 0.0
        %354 = vmatpush1.xpose.msra.mxu0 0.0
        %355 = vmatprep.subr.mxu0 0.0
        %356 = vmatpush1.xpose.msra.mxu0 0.0
        %357 = vmatprep.subr.mxu0 0.0
        %358 = vmatpush1.xpose.msra.mxu0 0.0
        %359 = vmatprep.subr.mxu0 0.0
        %360 = vmatpush1.xpose.msra.mxu0 0.0
        %361 = vmatprep.subr.mxu0 0.0
        %362 = vmatpush1.xpose.msra.mxu0 0.0
        %363 = vmatprep.subr.mxu0 0.0
        %364 = vmatpush1.xpose.msra.mxu0 0.0
        %365 = vmatprep.subr.mxu0 0.0
        %366 = vmatpush1.xpose.msra.mxu0 0.0
        %367 = vmatprep.subr.mxu0 0.0
        %368 = vmatpush1.xpose.msra.mxu0 0.0
        %369 = vmatprep.subr.mxu0 0.0
        %370 = vmatpush1.xpose.msra.mxu0 0.0
        %371 = vmatprep.subr.mxu0 0.0
        %372 = vmatpush1.xpose.msra.mxu0 0.0
        %373 = vmatprep.subr.mxu0 0.0
        %374 = vmatpush1.xpose.msra.mxu0 0.0
        %375 = vmatprep.subr.mxu0 0.0
        %376 = vmatpush1.xpose.msra.mxu0 0.0
        %377 = vmatprep.subr.mxu0 0.0
        %378 = vmatpush1.xpose.msra.mxu0 0.0
        %379 = vmatprep.subr.mxu0 0.0
        %380 = vmatpush1.xpose.msra.mxu0 0.0
        %381 = vmatprep.subr.mxu0 0.0
        %382 = vmatpush1.xpose.msra.mxu0 0.0
        %383 = vmatprep.subr.mxu0 0.0
        %384 = vmatpush1.xpose.msra.mxu0 0.0
        %385 = vmatprep.mubr.f32.mxu0 0.0
        %v386 = vand.u32 %v162, 4294901760
        %v387 = vsub.f32 %v162, %v386
        %388 = vmatmul.mubr.f32.gmra.mrb[0].mxu0 %v387
        %v389 = vpop.f32.mrb[0].mxu0
        %v390 = vadd.f32 %v316, %v389
        %v391 = vpop.f32.mrb[0].mxu0
        %392 = vdwg.mxu0
        %393 = vmatprep.subr.mxu0 0.0
        %v394 = vand.u32 %v165, 4294901760
        %395 = vmatpush1.xpose.msra.mxu0 %v394
        %396 = vmatprep.subr.mxu0 0.0
        %397 = vmatpush1.xpose.msra.mxu0 0.0
        %398 = vmatprep.subr.mxu0 0.0
        %399 = vmatpush1.xpose.msra.mxu0 0.0
        %400 = vmatprep.subr.mxu0 0.0
        %401 = vmatpush1.xpose.msra.mxu0 0.0
        %402 = vmatprep.subr.mxu0 0.0
        %403 = vmatpush1.xpose.msra.mxu0 0.0
        %404 = vmatprep.subr.mxu0 0.0
        %405 = vmatpush1.xpose.msra.mxu0 0.0
        %406 = vmatprep.subr.mxu0 0.0
        %407 = vmatpush1.xpose.msra.mxu0 0.0
        %408 = vmatprep.subr.mxu0 0.0
        %409 = vmatpush1.xpose.msra.mxu0 0.0
        %410 = vmatprep.subr.mxu0 0.0
        %411 = vmatpush1.xpose.msra.mxu0 0.0
        %412 = vmatprep.subr.mxu0 0.0
        %413 = vmatpush1.xpose.msra.mxu0 0.0
        %414 = vmatprep.subr.mxu0 0.0
        %415 = vmatpush1.xpose.msra.mxu0 0.0
        %416 = vmatprep.subr.mxu0 0.0
        %417 = vmatpush1.xpose.msra.mxu0 0.0
        %418 = vmatprep.subr.mxu0 0.0
        %419 = vmatpush1.xpose.msra.mxu0 0.0
        %420 = vmatprep.subr.mxu0 0.0
        %421 = vmatpush1.xpose.msra.mxu0 0.0
        %422 = vmatprep.subr.mxu0 0.0
        %423 = vmatpush1.xpose.msra.mxu0 0.0
        %424 = vmatprep.subr.mxu0 0.0
        %425 = vmatpush1.xpose.msra.mxu0 0.0
        %426 = vmatprep.subr.mxu0 0.0
        %427 = vmatpush1.xpose.msra.mxu0 0.0
        %428 = vmatprep.subr.mxu0 0.0
        %429 = vmatpush1.xpose.msra.mxu0 0.0
        %430 = vmatprep.subr.mxu0 0.0
        %431 = vmatpush1.xpose.msra.mxu0 0.0
        %432 = vmatprep.subr.mxu0 0.0
        %433 = vmatpush1.xpose.msra.mxu0 0.0
        %434 = vmatprep.subr.mxu0 0.0
        %435 = vmatpush1.xpose.msra.mxu0 0.0
        %436 = vmatprep.subr.mxu0 0.0
        %437 = vmatpush1.xpose.msra.mxu0 0.0
        %438 = vmatprep.subr.mxu0 0.0
        %439 = vmatpush1.xpose.msra.mxu0 0.0
        %440 = vmatprep.subr.mxu0 0.0
        %441 = vmatpush1.xpose.msra.mxu0 0.0
        %442 = vmatprep.subr.mxu0 0.0
        %443 = vmatpush1.xpose.msra.mxu0 0.0
        %444 = vmatprep.subr.mxu0 0.0
        %445 = vmatpush1.xpose.msra.mxu0 0.0
        %446 = vmatprep.subr.mxu0 0.0
        %447 = vmatpush1.xpose.msra.mxu0 0.0
        %448 = vmatprep.subr.mxu0 0.0
        %449 = vmatpush1.xpose.msra.mxu0 0.0
        %450 = vmatprep.subr.mxu0 0.0
        %451 = vmatpush1.xpose.msra.mxu0 0.0
        %452 = vmatprep.subr.mxu0 0.0
        %453 = vmatpush1.xpose.msra.mxu0 0.0
        %454 = vmatprep.subr.mxu0 0.0
        %455 = vmatpush1.xpose.msra.mxu0 0.0
        %456 = vmatprep.subr.mxu0 0.0
        %457 = vmatpush1.xpose.msra.mxu0 0.0
        %458 = vmatprep.mubr.f32.mxu0 0.0
        %v459 = vand.u32 %v162, 4294901760
        %v460 = vsub.f32 %v162, %v459
        %v461 = vand.u32 %v460, 4294901760
        %462 = vmatmul.mubr.f32.gmra.mrb[0].mxu0 %v461
        %v463 = vpop.f32.mrb[0].mxu0
        %v464 = vadd.f32 %v390, %v463
        %v465 = vpop.f32.mrb[0].mxu0
        %466 = vdwg.mxu0
        %467 = vmatprep.subr.mxu0 0.0
        %v468 = vand.u32 %v165, 4294901760
        %v469 = vsub.f32 %v165, %v468
        %v470 = vand.u32 %v469, 4294901760
        %471 = vmatpush1.xpose.msra.mxu0 %v470
        %472 = vmatprep.subr.mxu0 0.0
        %473 = vmatpush1.xpose.msra.mxu0 0.0
        %474 = vmatprep.subr.mxu0 0.0
        %475 = vmatpush1.xpose.msra.mxu0 0.0
        %476 = vmatprep.subr.mxu0 0.0
        %477 = vmatpush1.xpose.msra.mxu0 0.0
        %478 = vmatprep.subr.mxu0 0.0
        %479 = vmatpush1.xpose.msra.mxu0 0.0
        %480 = vmatprep.subr.mxu0 0.0
        %481 = vmatpush1.xpose.msra.mxu0 0.0
        %482 = vmatprep.subr.mxu0 0.0
        %483 = vmatpush1.xpose.msra.mxu0 0.0
        %484 = vmatprep.subr.mxu0 0.0
        %485 = vmatpush1.xpose.msra.mxu0 0.0
        %486 = vmatprep.subr.mxu0 0.0
        %487 = vmatpush1.xpose.msra.mxu0 0.0
        %488 = vmatprep.subr.mxu0 0.0
        %489 = vmatpush1.xpose.msra.mxu0 0.0
        %490 = vmatprep.subr.mxu0 0.0
        %491 = vmatpush1.xpose.msra.mxu0 0.0
        %492 = vmatprep.subr.mxu0 0.0
        %493 = vmatpush1.xpose.msra.mxu0 0.0
        %494 = vmatprep.subr.mxu0 0.0
        %495 = vmatpush1.xpose.msra.mxu0 0.0
        %496 = vmatprep.subr.mxu0 0.0
        %497 = vmatpush1.xpose.msra.mxu0 0.0
        %498 = vmatprep.subr.mxu0 0.0
        %499 = vmatpush1.xpose.msra.mxu0 0.0
        %500 = vmatprep.subr.mxu0 0.0
        %501 = vmatpush1.xpose.msra.mxu0 0.0
        %502 = vmatprep.subr.mxu0 0.0
        %503 = vmatpush1.xpose.msra.mxu0 0.0
        %504 = vmatprep.subr.mxu0 0.0
        %505 = vmatpush1.xpose.msra.mxu0 0.0
        %506 = vmatprep.subr.mxu0 0.0
        %507 = vmatpush1.xpose.msra.mxu0 0.0
        %508 = vmatprep.subr.mxu0 0.0
        %509 = vmatpush1.xpose.msra.mxu0 0.0
        %510 = vmatprep.subr.mxu0 0.0
        %511 = vmatpush1.xpose.msra.mxu0 0.0
        %512 = vmatprep.subr.mxu0 0.0
        %513 = vmatpush1.xpose.msra.mxu0 0.0
        %514 = vmatprep.subr.mxu0 0.0
        %515 = vmatpush1.xpose.msra.mxu0 0.0
        %516 = vmatprep.subr.mxu0 0.0
        %517 = vmatpush1.xpose.msra.mxu0 0.0
        %518 = vmatprep.subr.mxu0 0.0
        %519 = vmatpush1.xpose.msra.mxu0 0.0
        %520 = vmatprep.subr.mxu0 0.0
        %521 = vmatpush1.xpose.msra.mxu0 0.0
        %522 = vmatprep.subr.mxu0 0.0
        %523 = vmatpush1.xpose.msra.mxu0 0.0
        %524 = vmatprep.subr.mxu0 0.0
        %525 = vmatpush1.xpose.msra.mxu0 0.0
        %526 = vmatprep.subr.mxu0 0.0
        %527 = vmatpush1.xpose.msra.mxu0 0.0
        %528 = vmatprep.subr.mxu0 0.0
        %529 = vmatpush1.xpose.msra.mxu0 0.0
        %530 = vmatprep.subr.mxu0 0.0
        %531 = vmatpush1.xpose.msra.mxu0 0.0
        %532 = vmatprep.subr.mxu0 0.0
        %533 = vmatpush1.xpose.msra.mxu0 0.0
        %534 = vmatprep.mubr.f32.mxu0 0.0
        %v535 = vand.u32 %v162, 4294901760
        %536 = vmatmul.mubr.f32.gmra.mrb[0].mxu0 %v535
        %v537 = vpop.f32.mrb[0].mxu0
        %v538 = vadd.f32 %v464, %v537
        %v539 = vpop.f32.mrb[0].mxu0
        %540 = vdwg.mxu0
        %541 = vmatprep.subr.mxu0 0.0
        %v542 = vand.u32 %v165, 4294901760
        %543 = vmatpush1.xpose.msra.mxu0 %v542
        %544 = vmatprep.subr.mxu0 0.0
        %545 = vmatpush1.xpose.msra.mxu0 0.0
        %546 = vmatprep.subr.mxu0 0.0
        %547 = vmatpush1.xpose.msra.mxu0 0.0
        %548 = vmatprep.subr.mxu0 0.0
        %549 = vmatpush1.xpose.msra.mxu0 0.0
        %550 = vmatprep.subr.mxu0 0.0
        %551 = vmatpush1.xpose.msra.mxu0 0.0
        %552 = vmatprep.subr.mxu0 0.0
        %553 = vmatpush1.xpose.msra.mxu0 0.0
        %554 = vmatprep.subr.mxu0 0.0
        %555 = vmatpush1.xpose.msra.mxu0 0.0
        %556 = vmatprep.subr.mxu0 0.0
        %557 = vmatpush1.xpose.msra.mxu0 0.0
        %558 = vmatprep.subr.mxu0 0.0
        %559 = vmatpush1.xpose.msra.mxu0 0.0
        %560 = vmatprep.subr.mxu0 0.0
        %561 = vmatpush1.xpose.msra.mxu0 0.0
        %562 = vmatprep.subr.mxu0 0.0
        %563 = vmatpush1.xpose.msra.mxu0 0.0
        %564 = vmatprep.subr.mxu0 0.0
        %565 = vmatpush1.xpose.msra.mxu0 0.0
        %566 = vmatprep.subr.mxu0 0.0
        %567 = vmatpush1.xpose.msra.mxu0 0.0
        %568 = vmatprep.subr.mxu0 0.0
        %569 = vmatpush1.xpose.msra.mxu0 0.0
        %570 = vmatprep.subr.mxu0 0.0
        %571 = vmatpush1.xpose.msra.mxu0 0.0
        %572 = vmatprep.subr.mxu0 0.0
        %573 = vmatpush1.xpose.msra.mxu0 0.0
        %574 = vmatprep.subr.mxu0 0.0
        %575 = vmatpush1.xpose.msra.mxu0 0.0
        %576 = vmatprep.subr.mxu0 0.0
        %577 = vmatpush1.xpose.msra.mxu0 0.0
        %578 = vmatprep.subr.mxu0 0.0
        %579 = vmatpush1.xpose.msra.mxu0 0.0
        %580 = vmatprep.subr.mxu0 0.0
        %581 = vmatpush1.xpose.msra.mxu0 0.0
        %582 = vmatprep.subr.mxu0 0.0
        %583 = vmatpush1.xpose.msra.mxu0 0.0
        %584 = vmatprep.subr.mxu0 0.0
        %585 = vmatpush1.xpose.msra.mxu0 0.0
        %586 = vmatprep.subr.mxu0 0.0
        %587 = vmatpush1.xpose.msra.mxu0 0.0
        %588 = vmatprep.subr.mxu0 0.0
        %589 = vmatpush1.xpose.msra.mxu0 0.0
        %590 = vmatprep.subr.mxu0 0.0
        %591 = vmatpush1.xpose.msra.mxu0 0.0
        %592 = vmatprep.subr.mxu0 0.0
        %593 = vmatpush1.xpose.msra.mxu0 0.0
        %594 = vmatprep.subr.mxu0 0.0
        %595 = vmatpush1.xpose.msra.mxu0 0.0
        %596 = vmatprep.subr.mxu0 0.0
        %597 = vmatpush1.xpose.msra.mxu0 0.0
        %598 = vmatprep.subr.mxu0 0.0
        %599 = vmatpush1.xpose.msra.mxu0 0.0
        %600 = vmatprep.subr.mxu0 0.0
        %601 = vmatpush1.xpose.msra.mxu0 0.0
        %602 = vmatprep.subr.mxu0 0.0
        %603 = vmatpush1.xpose.msra.mxu0 0.0
        %604 = vmatprep.subr.mxu0 0.0
        %605 = vmatpush1.xpose.msra.mxu0 0.0
        %606 = vmatprep.mubr.f32.mxu0 0.0
        %v607 = vand.u32 %v162, 4294901760
        %608 = vmatmul.mubr.f32.gmra.mrb[0].mxu0 %v607
        %v609 = vpop.f32.mrb[0].mxu0
        %v610 = vadd.f32 %v538, %v609
        %v611 = vpop.f32.mrb[0].mxu0
        %612 = vdwg.mxu0
        %vm613 = vcmask 57344
        %v614 = vsel %vm613, %v610, -inf
        %615 = vmax.xlane.f32.xlu0 %v614
        %v616 = vpop.xlane.xlu0 %615
        %v617 = vsub.f32 %v610, %v616
        %v618 = vmul.f32 %v617, 1.442695
        %v619 = vpow.pop %v618
        %v620 = vsel %vm613, %v619, 0.0
        %621 = vadd.xlane.f32.xlu0 %v620
        %v622 = vpop.xlane.xlu0 %621
        %v623 = vrcp.pop %v622
        %v624 = vmul.f32 %v619, %v623
        %625 = vst.msk [vmem:[%s157] sm:$0x1] %vm613, %v624
        %s626 = sand.u32 %s74, 1
        %s627 = scalar_lea.sflag [#allocation4], %s626
        %s628 = sand.u32 %s74, 1
        %s629 = scalar_lea.vmem [#allocation5], %s628
        // Predicated region
        $region33: #{tpu_custom_call.1} parent=27 // pred_check
          %p630 = pneg %p84
        $region34: #{tpu_custom_call.1} parent=27 // pred_check_branch
          %632 = sbr.rel (%p630) target = $region36
        $region35: #{tpu_custom_call.1} parent=27 // pred_region
          %s634 = ssub.s32 16, 16
          %635 = vsyncadd %s627, %s634
          %s636 = smul.addr %s19, 16
          %s637 = scalar_lea.hbm %s2, %s636
          %s639 = sshll.u32 %s629, 4
          %s640 = int_to_ptr.vmem [resolvable:$true] %s639
          %642 = dma.vmem_to_hbm [thread:$0]  %s640, 16, %s637, %s627
        $region36: #{tpu_custom_call.1} parent=27 // pred_fallthru
          _
      $region28: #{tpu_custom_call.1} parent=5 // pred_fallthru
        _
      %p643 = scmp.le.s32.totalorder 2, %s14
      // Predicated region
      $region37: #{tpu_custom_call.1} parent=5 // pred_check
        %p644 = pneg %p643
      $region38: #{tpu_custom_call.1} parent=5 // pred_check_branch
        %646 = sbr.rel (%p644) target = $region40
      $region39: #{tpu_custom_call.1} parent=5 // pred_region
        %s647 = ssub.s32 %s14, 2
        // Predicated region
        $region41: #{tpu_custom_call.1} parent=39 // pred_check
          %p648 = pneg %p90
        $region42: #{tpu_custom_call.1} parent=39 // pred_check_branch
          %650 = sbr.rel (%p648) target = $region44
        $region43: #{tpu_custom_call.1} parent=39 // pred_region
          %s651 = sand.u32 %s75, 1
          %s652 = scalar_lea.sflag [#allocation4], %s651
          %s653 = sand.u32 %s75, 1
          %s654 = scalar_lea.vmem [#allocation5], %s653
          %655 = dma.done %s652, 16
        $region44: #{tpu_custom_call.1} parent=39 // pred_fallthru
          _
      $region40: #{tpu_custom_call.1} parent=5 // pred_fallthru
        _
    $region6: #{tpu_custom_call.1} parent=1 // loop_footer
      %s18 = sadd.s32 1, %s14
    $region7: #{tpu_custom_call.1} parent=1 // loop_footer_branch
      %13 = sbr.rel target = $region3
    $region8: #{tpu_custom_call.1} parent=1 // loop_exit
      _
    %656 = vsyncpa [#allocation3], 1
    %s657 = scalar_lea.sflag [#allocation3], 1
    %658 = vsyncpa %s657, 1
    %659 = vsyncpa [#allocation4], 1
    %s660 = scalar_lea.sflag [#allocation4], 1
    %661 = vsyncpa %s660, 1

</llo_original>
